<compile_context>
chip_gen: v6e
topology: v6e:2x2x1
jax: 0.10.0
libtpu: 0.0.40
codegen_flags: <defaults>
</compile_context>

<pallas_src>
import functools

import jax
import jax.numpy as jnp
from jax.experimental import pallas as pl
from jax.experimental.pallas import tpu as pltpu


HIDDEN = 100
HIDDEN_PAD = 128   # hidden padded to one full lane width
OUT_PAD = 128      # n_actions padded to a lane-dense output slab


def _round_up(x, m):
    return ((x + m - 1) // m) * m


def qfunction_kernel(x_ref, w1_ref, b1_ref, w2_ref, b2_ref, w3_ref, b3_ref,
                     q_ref, qmax_ref, act_ref, *, n_actions):
    # cast activations to the MXU input dtype in-kernel (VPU has huge slack here)
    x = x_ref[...].astype(w1_ref.dtype)
    # layer 1: relu(x @ W1 + b1) — bf16 MXU inputs, f32 accumulation, f32 VPU math
    h = jnp.dot(x, w1_ref[...], preferred_element_type=jnp.float32)
    h = jnp.maximum(h + b1_ref[...], 0.0)
    # layer 2: relu(h @ W2 + b2)
    h = jnp.dot(h.astype(w2_ref.dtype), w2_ref[...], preferred_element_type=jnp.float32)
    h = jnp.maximum(h + b2_ref[...], 0.0)
    # layer 3: raw Q-values (padded to 128 lanes; wrapper slices to n_actions)
    q = jnp.dot(h.astype(w3_ref.dtype), w3_ref[...], preferred_element_type=jnp.float32)
    q = q + b3_ref[...]
    q_ref[...] = q

    # Fused DiscreteActionValue bookkeeping: per-row max Q and greedy action.
    # Padded lanes [n_actions, 128) hold exact zeros in W3/b3 -> mask to -inf
    # so they can never beat an all-negative real Q row.
    lane = jax.lax.broadcasted_iota(jnp.int32, q.shape, 1)
    q_valid = jnp.where(lane < n_actions, q, -jnp.inf)
    qmax = jnp.max(q_valid, axis=-1, keepdims=True)
    qmax_ref[...] = qmax
    # first index attaining the max (matches torch.argmax tie-breaking)
    cand = jnp.where(q_valid == qmax, lane, jnp.int32(q.shape[-1]))
    act_ref[...] = jnp.min(cand, axis=-1, keepdims=True)


def init_params(key, obs_size, n_actions, hidden=HIDDEN):
    """Deterministic synthetic init matching torch.nn.Linear shapes (unpadded, f32)."""
    k1, k2, k3 = jax.random.split(key, 3)

    def linear(k, fan_in, fan_out):
        kw, kb = jax.random.split(k)
        bound = 1.0 / jnp.sqrt(jnp.float32(fan_in))
        # stored pre-transposed: (in, out)
        w = jax.random.uniform(kw, (fan_in, fan_out), jnp.float32, -bound, bound)
        b = jax.random.uniform(kb, (1, fan_out), jnp.float32, -bound, bound)
        return w, b

    w1, b1 = linear(k1, obs_size, hidden)
    w2, b2 = linear(k2, hidden, hidden)
    w3, b3 = linear(k3, hidden, n_actions)
    return {"w1": w1, "b1": b1, "w2": w2, "b2": b2, "w3": w3, "b3": b3}


def pack_params(params, obs_size, n_actions, *, dtype=jnp.bfloat16):
    """Zero-pad to TPU-friendly shapes; weights cast to `dtype`, biases kept f32."""
    obs_p = _round_up(obs_size, 16)     # K padded only to the bf16 sublane pack, never 128

    def pad_w(w, rows, cols):
        out = jnp.zeros((rows, cols), jnp.float32).at[: w.shape[0], : w.shape[1]].set(w)
        return out.astype(dtype)

    def pad_b(b, cols):
        return jnp.zeros((1, cols), jnp.float32).at[:, : b.shape[1]].set(b)

    return {
        "w1": pad_w(params["w1"], obs_p, HIDDEN_PAD), "b1": pad_b(params["b1"], HIDDEN_PAD),
        "w2": pad_w(params["w2"], HIDDEN_PAD, HIDDEN_PAD), "b2": pad_b(params["b2"], HIDDEN_PAD),
        "w3": pad_w(params["w3"], HIDDEN_PAD, OUT_PAD), "b3": pad_b(params["b3"], OUT_PAD),
    }


def qfunction_forward(x, packed, n_actions, *, block_b=1024, core_parallel=False):
    """x: (B, obs_size) f32.  packed: output of pack_params.

    Returns (q, q_max, greedy_action):
      q:              (B, n_actions) f32 raw Q-values (module forward semantics)
      q_max:          (B,)           f32 max_a Q(s, a)      (fused in-kernel)
      greedy_action:  (B,)           int32 argmax_a Q(s, a) (fused in-kernel)
    """
    w1, b1 = packed["w1"], packed["b1"]
    w2, b2 = packed["w2"], packed["b2"]
    w3, b3 = packed["w3"], packed["b3"]
    B, obs = x.shape
    obs_p = w1.shape[0]
    hp = w1.shape[1]
    op = w3.shape[1]

    # Tile selection: divide the batch as evenly as possible into <=block_b row
    # tiles (multiples of 16) so the last tile isn't mostly zero padding.  A
    # single-tile batch uses tb == B (block == full array dim), i.e. no padding.
    n_tiles = max(1, -(-B // block_b))
    if n_tiles == 1:
        tb = B
    else:
        tb = _round_up(-(-B // n_tiles), 16)
    b_pad = tb * n_tiles

    # Feed x directly (f32, cast in-kernel) unless padding is actually required.
    if b_pad != B or obs_p != obs:
        x_in = jnp.zeros((b_pad, obs_p), x.dtype).at[:B, :obs].set(x)
    else:
        x_in = x

    grid = (n_tiles,)

    def resident(shape):
        # weights / biases: same block every grid step -> fetched once, VMEM-resident
        return pl.BlockSpec(shape, lambda i: (0, 0))

    dim_sem = (pltpu.CORE_PARALLEL,) if core_parallel else ("parallel",)

    q, qmax, act = pl.pallas_call(
        functools.partial(qfunction_kernel, n_actions=n_actions),
        out_shape=(
            jax.ShapeDtypeStruct((b_pad, op), jnp.float32),   # Q slab (lane-dense)
            jax.ShapeDtypeStruct((b_pad, 1), jnp.float32),    # fused max Q
            jax.ShapeDtypeStruct((b_pad, 1), jnp.int32),      # fused greedy action
        ),
        grid=grid,
        in_specs=[
            pl.BlockSpec((tb, obs_p), lambda i: (i, 0)),      # x: tiled over batch
            resident((obs_p, hp)), resident((1, hp)),         # W1, b1
            resident((hp, hp)), resident((1, hp)),            # W2, b2
            resident((hp, op)), resident((1, op)),            # W3, b3
        ],
        out_specs=(
            pl.BlockSpec((tb, op), lambda i: (i, 0)),
            pl.BlockSpec((tb, 1), lambda i: (i, 0)),
            pl.BlockSpec((tb, 1), lambda i: (i, 0)),
        ),
        compiler_params=pltpu.CompilerParams(
            # core_parallel=True gives real 2-TC sharding of the batch axis on
            # v7x; the plain-"parallel" default is safe on 1-TC v5e/v6e.
            dimension_semantics=dim_sem,
        ),
    )(x_in, w1, b1, w2, b2, w3, b3)

    # Slice padded batch rows / padded action lanes back off.  Downstream
    # action selection should use the fused q_max / greedy_action outputs and
    # only touch the Q slab when the raw values are actually needed.
    return q[:B, :n_actions], qmax[:B, 0], act[:B, 0]


def reference_forward_packed(x, packed, n_actions):
    """Plain-JAX reference with the same padded bf16 weights / f32 accumulation."""
    dtype = packed["w1"].dtype
    obs_p = packed["w1"].shape[0]
    B, obs = x.shape
    xp = jnp.zeros((B, obs_p), jnp.float32).at[:, :obs].set(x).astype(dtype)
    h = jnp.dot(xp, packed["w1"], preferred_element_type=jnp.float32) + packed["b1"]
    h = jnp.maximum(h, 0.0)
    h = jnp.dot(h.astype(dtype), packed["w2"], preferred_element_type=jnp.float32) + packed["b2"]
    h = jnp.maximum(h, 0.0)
    q = jnp.dot(h.astype(dtype), packed["w3"], preferred_element_type=jnp.float32) + packed["b3"]
    return q[:, :n_actions]


def reference_forward_f32(x, params):
    """Pure-f32 reference matching the original PyTorch QFunction math exactly."""
    h = jnp.maximum(x @ params["w1"] + params["b1"], 0.0)
    h = jnp.maximum(h @ params["w2"] + params["b2"], 0.0)
    return h @ params["w3"] + params["b3"]


if __name__ == "__main__":
    # Small shapes consistent with the module: flat observation vector through
    # Linear(obs_size,100) -> Linear(100,100) -> Linear(100,n_actions).
    batch, obs_size, n_actions = 2, 16, 3

    key = jax.random.PRNGKey(0)
    kx, kp = jax.random.split(key)
    x = jax.random.normal(kx, (batch, obs_size), jnp.float32)

    raw_params = init_params(kp, obs_size, n_actions)
    packed = pack_params(raw_params, obs_size, n_actions, dtype=jnp.bfloat16)

    q, q_max, greedy = qfunction_forward(x, packed, n_actions)
    q = jax.block_until_ready(q)

    # 1) tight check vs the same bf16-weight / f32-accumulation math
    q_ref_packed = reference_forward_packed(x, packed, n_actions)
    assert q.shape == (batch, n_actions)
    assert jnp.allclose(q, q_ref_packed, atol=1e-2, rtol=1e-2), "mismatch vs packed-bf16 reference"

    # 2) pure-f32 reference: documents the bf16 weight/activation quantization error
    q_ref_f32 = reference_forward_f32(x, raw_params)
    assert jnp.allclose(q, q_ref_f32, atol=2e-2, rtol=2e-2), "mismatch vs pure-f32 reference"

    # 3) fused DiscreteActionValue epilogue must agree with the emitted Q-values
    assert jnp.allclose(q_max, jnp.max(q, axis=-1)), "fused max mismatch"
    assert jnp.array_equal(greedy, jnp.argmax(q, axis=-1).astype(jnp.int32)), "fused argmax mismatch"

    # TODO(synk): pfrl.action_value.DiscreteActionValue is a host-side wrapper object;
    # the kernel supplies its contents (raw Q, max Q, greedy action) but not the class.
    print("KERNEL_OK")
</pallas_src>

<mosaic_0001>
module attributes {stable_mosaic.version = 11 : i64} {
  func.func @qfunction_kernel(%arg0: i32, %arg1: memref<2x16xf32, #tpu.memory_space<vmem>>, %arg2: memref<16x128xbf16, #tpu.memory_space<vmem>>, %arg3: memref<1x128xf32, #tpu.memory_space<vmem>>, %arg4: memref<128x128xbf16, #tpu.memory_space<vmem>>, %arg5: memref<1x128xf32, #tpu.memory_space<vmem>>, %arg6: memref<128x128xbf16, #tpu.memory_space<vmem>>, %arg7: memref<1x128xf32, #tpu.memory_space<vmem>>, %arg8: memref<2x128xf32, #tpu.memory_space<vmem>>, %arg9: memref<2x1xf32, #tpu.memory_space<vmem>>, %arg10: memref<2x1xi32, #tpu.memory_space<vmem>>) attributes {dimension_semantics = [#tpu.dimension_semantics<parallel>], iteration_bounds = array<i64: 1>, scalar_prefetch = 0 : i64, scratch_operands = 0 : i64, tpu.core_type = #tpu.core_type<tc>, window_params = [{transform_indices = @transform_0, window_bounds = array<i64: 2, 16>}, {pipeline_mode = #tpu.pipeline_mode<synchronous>, transform_indices = @transform_1, window_bounds = array<i64: 16, 128>}, {pipeline_mode = #tpu.pipeline_mode<synchronous>, transform_indices = @transform_2, window_bounds = array<i64: 1, 128>}, {pipeline_mode = #tpu.pipeline_mode<synchronous>, transform_indices = @transform_3, window_bounds = array<i64: 128, 128>}, {pipeline_mode = #tpu.pipeline_mode<synchronous>, transform_indices = @transform_4, window_bounds = array<i64: 1, 128>}, {pipeline_mode = #tpu.pipeline_mode<synchronous>, transform_indices = @transform_5, window_bounds = array<i64: 128, 128>}, {pipeline_mode = #tpu.pipeline_mode<synchronous>, transform_indices = @transform_6, window_bounds = array<i64: 1, 128>}, {transform_indices = @transform_7, window_bounds = array<i64: 2, 128>}, {transform_indices = @transform_8, window_bounds = array<i64: 2, 1>}, {transform_indices = @transform_9, window_bounds = array<i64: 2, 1>}]} {
    %c0 = arith.constant 0 : index
    %c0_0 = arith.constant 0 : index
    %0 = vector.load %arg1[%c0, %c0_0] : memref<2x16xf32, #tpu.memory_space<vmem>>, vector<2x16xf32>
    %1 = arith.truncf %0 : vector<2x16xf32> to vector<2x16xbf16>
    %c0_1 = arith.constant 0 : index
    %c0_2 = arith.constant 0 : index
    %2 = vector.load %arg2[%c0_1, %c0_2] : memref<16x128xbf16, #tpu.memory_space<vmem>>, vector<16x128xbf16>
    %cst = arith.constant dense<0.000000e+00> : vector<2x128xf32>
    %3 = tpu.matmul %1, %2, %cst {dimension_numbers = #tpu.dot_dimension_numbers<[1], [0], [0], [1], [0, 0, 1, 1], [], []>} : vector<2x16xbf16>, vector<16x128xbf16>, vector<2x128xf32> -> vector<2x128xf32>
    %c0_3 = arith.constant 0 : index
    %c0_4 = arith.constant 0 : index
    %4 = vector.load %arg3[%c0_3, %c0_4] : memref<1x128xf32, #tpu.memory_space<vmem>>, vector<1x128xf32>
    %5 = vector.broadcast %4 : vector<1x128xf32> to vector<2x128xf32>
    %6 = arith.addf %3, %5 : vector<2x128xf32>
    %cst_5 = arith.constant 0.000000e+00 : f32
    %7 = vector.broadcast %cst_5 : f32 to vector<2x128xf32>
    %8 = arith.maximumf %6, %7 : vector<2x128xf32>
    %9 = arith.truncf %8 : vector<2x128xf32> to vector<2x128xbf16>
    %c0_6 = arith.constant 0 : index
    %c0_7 = arith.constant 0 : index
    %10 = vector.load %arg4[%c0_6, %c0_7] : memref<128x128xbf16, #tpu.memory_space<vmem>>, vector<128x128xbf16>
    %cst_8 = arith.constant dense<0.000000e+00> : vector<2x128xf32>
    %11 = tpu.matmul %9, %10, %cst_8 {dimension_numbers = #tpu.dot_dimension_numbers<[1], [0], [0], [1], [0, 0, 1, 1], [], []>} : vector<2x128xbf16>, vector<128x128xbf16>, vector<2x128xf32> -> vector<2x128xf32>
    %c0_9 = arith.constant 0 : index
    %c0_10 = arith.constant 0 : index
    %12 = vector.load %arg5[%c0_9, %c0_10] : memref<1x128xf32, #tpu.memory_space<vmem>>, vector<1x128xf32>
    %13 = vector.broadcast %12 : vector<1x128xf32> to vector<2x128xf32>
    %14 = arith.addf %11, %13 : vector<2x128xf32>
    %cst_11 = arith.constant 0.000000e+00 : f32
    %15 = vector.broadcast %cst_11 : f32 to vector<2x128xf32>
    %16 = arith.maximumf %14, %15 : vector<2x128xf32>
    %17 = arith.truncf %16 : vector<2x128xf32> to vector<2x128xbf16>
    %c0_12 = arith.constant 0 : index
    %c0_13 = arith.constant 0 : index
    %18 = vector.load %arg6[%c0_12, %c0_13] : memref<128x128xbf16, #tpu.memory_space<vmem>>, vector<128x128xbf16>
    %cst_14 = arith.constant dense<0.000000e+00> : vector<2x128xf32>
    %19 = tpu.matmul %17, %18, %cst_14 {dimension_numbers = #tpu.dot_dimension_numbers<[1], [0], [0], [1], [0, 0, 1, 1], [], []>} : vector<2x128xbf16>, vector<128x128xbf16>, vector<2x128xf32> -> vector<2x128xf32>
    %c0_15 = arith.constant 0 : index
    %c0_16 = arith.constant 0 : index
    %20 = vector.load %arg7[%c0_15, %c0_16] : memref<1x128xf32, #tpu.memory_space<vmem>>, vector<1x128xf32>
    %21 = vector.broadcast %20 : vector<1x128xf32> to vector<2x128xf32>
    %22 = arith.addf %19, %21 : vector<2x128xf32>
    %c0_17 = arith.constant 0 : index
    %c0_18 = arith.constant 0 : index
    %23 = vector.load %arg8[%c0_17, %c0_18] : memref<2x128xf32, #tpu.memory_space<vmem>>, vector<2x128xf32>
    tpu.vector_store %arg8[%c0_17, %c0_18], %22 {strides = array<i32>} : memref<2x128xf32, #tpu.memory_space<vmem>>, vector<2x128xf32>,
    %24 = tpu.iota {dimensions = array<i32: 1>} : vector<2x128xi32>
    %c3_i32 = arith.constant 3 : i32
    %25 = vector.broadcast %c3_i32 : i32 to vector<2x128xi32>
    %26 = arith.cmpi slt, %24, %25 : vector<2x128xi32>
    %cst_19 = arith.constant 0xFF800000 : f32
    %27 = vector.broadcast %cst_19 : f32 to vector<2x128xf32>
    %28 = arith.select %26, %22, %27 : vector<2x128xi1>, vector<2x128xf32>
    %cst_20 = arith.constant dense<0xFF800000> : vector<2xf32>
    %29 = vector.multi_reduction <maximumf>, %28, %cst_20 [1] : vector<2x128xf32> to vector<2xf32>
    %30 = vector.shape_cast %29 : vector<2xf32> to vector<2x1xf32>
    %c0_21 = arith.constant 0 : index
    %c0_22 = arith.constant 0 : index
    %31 = vector.load %arg9[%c0_21, %c0_22] : memref<2x1xf32, #tpu.memory_space<vmem>>, vector<2x1xf32>
    tpu.vector_store %arg9[%c0_21, %c0_22], %30 {strides = array<i32>} : memref<2x1xf32, #tpu.memory_space<vmem>>, vector<2x1xf32>,
    %32 = vector.broadcast %30 : vector<2x1xf32> to vector<2x128xf32>
    %33 = arith.cmpf oeq, %28, %32 : vector<2x128xf32>
    %c128_i32 = arith.constant 128 : i32
    %34 = vector.broadcast %c128_i32 : i32 to vector<2x128xi32>
    %35 = arith.select %33, %24, %34 : vector<2x128xi1>, vector<2x128xi32>
    %cst_23 = arith.constant dense<2147483647> : vector<2xi32>
    %36 = vector.multi_reduction <minsi>, %35, %cst_23 [1] : vector<2x128xi32> to vector<2xi32>
    %37 = vector.shape_cast %36 : vector<2xi32> to vector<2x1xi32>
    %c0_24 = arith.constant 0 : index
    %c0_25 = arith.constant 0 : index
    %38 = vector.load %arg10[%c0_24, %c0_25] : memref<2x1xi32, #tpu.memory_space<vmem>>, vector<2x1xi32>
    tpu.vector_store %arg10[%c0_24, %c0_25], %37 {strides = array<i32>} : memref<2x1xi32, #tpu.memory_space<vmem>>, vector<2x1xi32>,
    return
  }
  func.func @transform_0(%arg0: i32) -> (i32, i32) {
    %c0_i32 = arith.constant 0 : i32
    %c0_i32_0 = arith.constant 0 : i32
    return %arg0, %c0_i32 : i32, i32
  }
  func.func @transform_1(%arg0: i32) -> (i32, i32) {
    %c0_i32 = arith.constant 0 : i32
    %c0_i32_0 = arith.constant 0 : i32
    %c0_i32_1 = arith.constant 0 : i32
    return %c0_i32, %c0_i32_0 : i32, i32
  }
  func.func @transform_2(%arg0: i32) -> (i32, i32) {
    %c0_i32 = arith.constant 0 : i32
    %c0_i32_0 = arith.constant 0 : i32
    %c0_i32_1 = arith.constant 0 : i32
    return %c0_i32, %c0_i32_0 : i32, i32
  }
  func.func @transform_3(%arg0: i32) -> (i32, i32) {
    %c0_i32 = arith.constant 0 : i32
    %c0_i32_0 = arith.constant 0 : i32
    %c0_i32_1 = arith.constant 0 : i32
    return %c0_i32, %c0_i32_0 : i32, i32
  }
  func.func @transform_4(%arg0: i32) -> (i32, i32) {
    %c0_i32 = arith.constant 0 : i32
    %c0_i32_0 = arith.constant 0 : i32
    %c0_i32_1 = arith.constant 0 : i32
    return %c0_i32, %c0_i32_0 : i32, i32
  }
  func.func @transform_5(%arg0: i32) -> (i32, i32) {
    %c0_i32 = arith.constant 0 : i32
    %c0_i32_0 = arith.constant 0 : i32
    %c0_i32_1 = arith.constant 0 : i32
    return %c0_i32, %c0_i32_0 : i32, i32
  }
  func.func @transform_6(%arg0: i32) -> (i32, i32) {
    %c0_i32 = arith.constant 0 : i32
    %c0_i32_0 = arith.constant 0 : i32
    %c0_i32_1 = arith.constant 0 : i32
    return %c0_i32, %c0_i32_0 : i32, i32
  }
  func.func @transform_7(%arg0: i32) -> (i32, i32) {
    %c0_i32 = arith.constant 0 : i32
    %c0_i32_0 = arith.constant 0 : i32
    return %arg0, %c0_i32 : i32, i32
  }
  func.func @transform_8(%arg0: i32) -> (i32, i32) {
    %c0_i32 = arith.constant 0 : i32
    %c0_i32_0 = arith.constant 0 : i32
    return %arg0, %c0_i32 : i32, i32
  }
  func.func @transform_9(%arg0: i32) -> (i32, i32) {
    %c0_i32 = arith.constant 0 : i32
    %c0_i32_0 = arith.constant 0 : i32
    return %arg0, %c0_i32 : i32, i32
  }
}

</mosaic_0001>

<llo_original>
// kernel: tpu_custom_call.1
$region0: #{tpu_custom_call.1}
  #allocation0 [shape = 'u32[]', space=smem, size = 0x4, offset = 0x4, fixed_abs, tag = 'smem constant byte address 0x4 - core index']
  #allocation1 [shape = 'u32[144,128]{1,0:T(1,128)}', space=vmem, size = 0x12000, scoped, tag = 'internal scratch']
  %s0 = inlined_call_operand.hbm [shape: f32[2,16], index: 0, kind: input, shape index: {}]
  %s1 = inlined_call_operand.hbm [shape: bf16[16,128], index: 1, kind: input, shape index: {}]
  %s2 = inlined_call_operand.vmem [shape: f32[1,128], index: 2, kind: input, shape index: {}]
  %s3 = inlined_call_operand.hbm [shape: bf16[128,128], index: 3, kind: input, shape index: {}]
  %s4 = inlined_call_operand.vmem [shape: f32[1,128], index: 4, kind: input, shape index: {}]
  %s5 = inlined_call_operand.hbm [shape: bf16[128,128], index: 5, kind: input, shape index: {}]
  %s6 = inlined_call_operand.vmem [shape: f32[1,128], index: 6, kind: input, shape index: {}]
  %s7 = inlined_call_operand.hbm [shape: f32[2,128], index: 7, kind: output, shape index: {0}]
  %s8 = inlined_call_operand.vmem [shape: f32[2,1], index: 8, kind: output, shape index: {1}]
  %s9 = inlined_call_operand.vmem [shape: s32[2,1], index: 9, kind: output, shape index: {2}]
  %10 = xla_tuple %s7, %s8, %s9
  %s11 = sld [smem:[#allocation0]]
  $region70: #{tpu_custom_call.1} parent=0
    _
  %s13 = ssub.s32 1, %s11
  %s14 = scalar_select 0, %s13, %s11
  $region1: #{tpu_custom_call.1} parent=0
    #allocation2 [shape = 'u8[1024]{0}', space=vmem, size = 0x400, scoped, tag = 'input window, operand 0, single buffered']
    #allocation3 [shape = 's32[1]{0}', space=sflag, size = 0x4, scoped, tag = 'scoped memory for tpu_custom_call.1']
    #allocation4 [shape = 's32[1]{0}', space=sflag, size = 0x4, scoped, tag = 'scoped memory for tpu_custom_call.1']
    #allocation5 [shape = 'u8[4096]{0}', space=vmem, size = 0x1000, scoped, tag = 'input window, operand 1, single buffered']
    #allocation6 [shape = 's32[1]{0}', space=sflag, size = 0x4, scoped, tag = 'scoped memory for tpu_custom_call.1']
    #allocation7 [shape = 'u8[32768]{0}', space=vmem, size = 0x8000, scoped, tag = 'input window, operand 3, single buffered']
    #allocation8 [shape = 'u8[32768]{0}', space=vmem, size = 0x8000, scoped, tag = 'input window, operand 5, single buffered']
    #allocation9 [shape = 's32[1]{0}', space=sflag, size = 0x4, scoped, tag = 'scoped memory for tpu_custom_call.1']
    #allocation10 [shape = 'u8[1024]{0}', space=vmem, size = 0x400, scoped, tag = 'output window, operand 0, single buffered']
    %15 = vsyncpa [#allocation3], 0
    %16 = vsyncpa [#allocation6], 0
    %17 = vsyncpa [#allocation9], 0
    %18 = vsyncpa [#allocation4], 0
    // Predicated region
    $region2: #{tpu_custom_call.1} parent=1 // pred_check
      _
    $region3: #{tpu_custom_call.1} parent=1 // pred_check_branch
      %20 = sbr.rel (0) target = $region5
    $region4: #{tpu_custom_call.1} parent=1 // pred_region
      %s22 = ssub.s32 32, 32
      %23 = vsyncadd [#allocation3], %s22
      %s25 = sshll.u32 [#allocation2], 4
      %s26 = int_to_ptr.vmem [resolvable:$true] %s25
      %28 = dma.hbm_to_vmem [thread:$0]  %s0, 32, %s26, [#allocation3]
    $region5: #{tpu_custom_call.1} parent=1 // pred_fallthru
      _
    // Predicated region
    $region6: #{tpu_custom_call.1} parent=1 // pred_check
      _
    $region7: #{tpu_custom_call.1} parent=1 // pred_check_branch
      %30 = sbr.rel (0) target = $region9
    $region8: #{tpu_custom_call.1} parent=1 // pred_region
      %s32 = ssub.s32 128, 128
      %33 = vsyncadd [#allocation6], %s32
      %s34 = sshll.u32 [#allocation5], 4
      %s35 = int_to_ptr.vmem [resolvable:$true] %s34
      %40 = dma.hbm_to_vmem [thread:$0]  %s1, 128, %s35, [#allocation6], 64, 64, 4
    $region9: #{tpu_custom_call.1} parent=1 // pred_fallthru
      _
    // Predicated region
    $region10: #{tpu_custom_call.1} parent=1 // pred_check
      _
    $region11: #{tpu_custom_call.1} parent=1 // pred_check_branch
      %42 = sbr.rel (0) target = $region13
    $region12: #{tpu_custom_call.1} parent=1 // pred_region
      _
    $region13: #{tpu_custom_call.1} parent=1 // pred_fallthru
      _
    // Predicated region
    $region14: #{tpu_custom_call.1} parent=1 // pred_check
      _
    $region15: #{tpu_custom_call.1} parent=1 // pred_check_branch
      %44 = sbr.rel (0) target = $region17
    $region16: #{tpu_custom_call.1} parent=1 // pred_region
      %s46 = ssub.s32 1024, 1024
      %47 = vsyncadd [#allocation6], %s46
      %s48 = sshll.u32 [#allocation7], 4
      %s49 = int_to_ptr.vmem [resolvable:$true] %s48
      %54 = dma.hbm_to_vmem [thread:$0]  %s3, 1024, %s49, [#allocation6], 64, 64, 4
    $region17: #{tpu_custom_call.1} parent=1 // pred_fallthru
      _
    // Predicated region
    $region18: #{tpu_custom_call.1} parent=1 // pred_check
      _
    $region19: #{tpu_custom_call.1} parent=1 // pred_check_branch
      %56 = sbr.rel (0) target = $region21
    $region20: #{tpu_custom_call.1} parent=1 // pred_region
      _
    $region21: #{tpu_custom_call.1} parent=1 // pred_fallthru
      _
    // Predicated region
    $region22: #{tpu_custom_call.1} parent=1 // pred_check
      _
    $region23: #{tpu_custom_call.1} parent=1 // pred_check_branch
      %58 = sbr.rel (0) target = $region25
    $region24: #{tpu_custom_call.1} parent=1 // pred_region
      %s60 = ssub.s32 1024, 1024
      %61 = vsyncadd [#allocation9], %s60
      %s62 = sshll.u32 [#allocation8], 4
      %s63 = int_to_ptr.vmem [resolvable:$true] %s62
      %68 = dma.hbm_to_vmem [thread:$0]  %s5, 1024, %s63, [#allocation9], 64, 64, 4
    $region25: #{tpu_custom_call.1} parent=1 // pred_fallthru
      _
    // Predicated region
    $region26: #{tpu_custom_call.1} parent=1 // pred_check
      _
    $region27: #{tpu_custom_call.1} parent=1 // pred_check_branch
      %70 = sbr.rel (0) target = $region29
    $region28: #{tpu_custom_call.1} parent=1 // pred_region
      _
    $region29: #{tpu_custom_call.1} parent=1 // pred_fallthru
      _
    // Predicated region
    $region30: #{tpu_custom_call.1} parent=1 // pred_check
      _
    $region31: #{tpu_custom_call.1} parent=1 // pred_check_branch
      %72 = sbr.rel (0) target = $region33
    $region32: #{tpu_custom_call.1} parent=1 // pred_region
      %73 = dma.done [#allocation3], 32
    $region33: #{tpu_custom_call.1} parent=1 // pred_fallthru
      _
    // Predicated region
    $region34: #{tpu_custom_call.1} parent=1 // pred_check
      _
    $region35: #{tpu_custom_call.1} parent=1 // pred_check_branch
      %75 = sbr.rel (0) target = $region37
    $region36: #{tpu_custom_call.1} parent=1 // pred_region
      %76 = dma.done [#allocation6], 128
    $region37: #{tpu_custom_call.1} parent=1 // pred_fallthru
      _
    // Predicated region
    $region38: #{tpu_custom_call.1} parent=1 // pred_check
      _
    $region39: #{tpu_custom_call.1} parent=1 // pred_check_branch
      %78 = sbr.rel (0) target = $region41
    $region40: #{tpu_custom_call.1} parent=1 // pred_region
      %79 = dma.done [#allocation6], 1024
    $region41: #{tpu_custom_call.1} parent=1 // pred_fallthru
      _
    // Predicated region
    $region42: #{tpu_custom_call.1} parent=1 // pred_check
      _
    $region43: #{tpu_custom_call.1} parent=1 // pred_check_branch
      %81 = sbr.rel (0) target = $region45
    $region44: #{tpu_custom_call.1} parent=1 // pred_region
      %82 = dma.done [#allocation9], 1024
    $region45: #{tpu_custom_call.1} parent=1 // pred_fallthru
      _
    %v84 = vld [vmem:[#allocation2] sm:$0x3]
    %v85 = vpack.c.bf16 %v84, %v84
    %v86 = vld [vmem:[#allocation5] sm:$0xf]
    %v87 = vld [vmem:[#allocation5 + $0x4] sm:$0xf]
    %v88 = vld [vmem:[%s2] sm:$0x1]
    %v90 = vlaneseq
    %v91 = vshrl.u32 %v90, 7
    %v92 = vsub.s32 0, %v91
    %v93 = vrot.slane %v88, %v92
    %v97 = vunpack.c.l.b16 %v86
    %v98 = vunpack.c.l.b16 %v87
    %v99 = vpack.c.b16 %v98, %v97
    %vm101 = vcmask 130048
    %v103 = vsel %vm101, %v85, 0
    %105 = vmatprep.subr.bf16.mxu0 0
    %106 = vmatpush1.bf16.msra.mxu0 0
    %107 = vmatprep.subr.bf16.mxu0 0
    %108 = vmatpush1.bf16.msra.mxu0 0
    %109 = vmatprep.subr.bf16.mxu0 0
    %110 = vmatpush1.bf16.msra.mxu0 0
    %111 = vmatprep.subr.bf16.mxu0 0
    %112 = vmatpush1.bf16.msra.mxu0 0
    %113 = vmatprep.subr.bf16.mxu0 0
    %114 = vmatpush1.bf16.msra.mxu0 0
    %115 = vmatprep.subr.bf16.mxu0 0
    %116 = vmatpush1.bf16.msra.mxu0 0
    %117 = vmatprep.subr.bf16.mxu0 0
    %118 = vmatpush1.bf16.msra.mxu0 0
    %119 = vmatprep.subr.bf16.mxu0 0
    %120 = vmatpush1.bf16.msra.mxu0 %v99
    %121 = vmatprep.subr.bf16.mxu0 0
    %122 = vmatpush2.bf16.msra.mxu0 0
    %123 = vmatprep.subr.bf16.mxu0 0
    %124 = vmatpush2.bf16.msra.mxu0 0
    %125 = vmatprep.subr.bf16.mxu0 0
    %126 = vmatpush2.bf16.msra.mxu0 0
    %127 = vmatprep.subr.bf16.mxu0 0
    %128 = vmatpush2.bf16.msra.mxu0 0
    %129 = vmatprep.subr.bf16.mxu0 0
    %130 = vmatpush2.bf16.msra.mxu0 0
    %131 = vmatprep.subr.bf16.mxu0 0
    %132 = vmatpush2.bf16.msra.mxu0 0
    %133 = vmatprep.subr.bf16.mxu0 0
    %134 = vmatpush2.bf16.msra.mxu0 0
    %135 = vmatprep.subr.bf16.mxu0 0
    %136 = vmatpush2.bf16.msra.mxu0 0
    %137 = vmatprep.mubr.bf16.mxu0 0
    %138 = vmatmul.mubr.bf16.gmra.mxu0 %v103
    %v139 = vpop.f32.mrf.mxu0
    %v140 = vadd.f32 %v93, %v139
    %v141 = vpop.f32.mrf.mxu0
    %v142 = vpop.f32.mrf.mxu0
    %v143 = vpop.f32.mrf.mxu0
    %144 = vdwg.mxu0
    %v145 = vmax.f32 %v140, 0.0
    %v146 = vpack.c.bf16 %v145, %v145
    %v147 = vld [vmem:[#allocation7] sm:$0xf]
    %v148 = vld [vmem:[#allocation7 + $0x4] sm:$0xf]
    %v149 = vld [vmem:[#allocation7 + $0x8] sm:$0xf]
    %v150 = vld [vmem:[#allocation7 + $0xc] sm:$0xf]
    %v151 = vld [vmem:[#allocation7 + $0x10] sm:$0xf]
    %v152 = vld [vmem:[#allocation7 + $0x14] sm:$0xf]
    %v153 = vld [vmem:[#allocation7 + $0x18] sm:$0xf]
    %v154 = vld [vmem:[#allocation7 + $0x1c] sm:$0xf]
    %v155 = vld [vmem:[#allocation7 + $0x20] sm:$0xf]
    %v156 = vld [vmem:[#allocation7 + $0x24] sm:$0xf]
    %v157 = vld [vmem:[#allocation7 + $0x28] sm:$0xf]
    %v158 = vld [vmem:[#allocation7 + $0x2c] sm:$0xf]
    %v159 = vld [vmem:[#allocation7 + $0x30] sm:$0xf]
    %v160 = vld [vmem:[#allocation7 + $0x34] sm:$0xf]
    %v161 = vld [vmem:[#allocation7 + $0x38] sm:$0xf]
    %v162 = vld [vmem:[#allocation7 + $0x3c] sm:$0xf]
    %v163 = vld [vmem:[%s4] sm:$0x1]
    %v165 = vlaneseq
    %v166 = vshrl.u32 %v165, 7
    %v167 = vsub.s32 0, %v166
    %v168 = vrot.slane %v163, %v167
    %v186 = vunpack.c.l.b16 %v147
    %v187 = vunpack.c.l.b16 %v148
    %v188 = vunpack.c.l.b16 %v149
    %v189 = vunpack.c.l.b16 %v150
    %v190 = vunpack.c.l.b16 %v151
    %v191 = vunpack.c.l.b16 %v152
    %v192 = vunpack.c.l.b16 %v153
    %v193 = vunpack.c.l.b16 %v154
    %v194 = vunpack.c.l.b16 %v155
    %v195 = vunpack.c.l.b16 %v156
    %v196 = vunpack.c.l.b16 %v157
    %v197 = vunpack.c.l.b16 %v158
    %v198 = vunpack.c.l.b16 %v159
    %v199 = vunpack.c.l.b16 %v160
    %v200 = vunpack.c.l.b16 %v161
    %v201 = vunpack.c.l.b16 %v162
    %v202 = vpack.c.b16 %v187, %v186
    %v203 = vpack.c.b16 %v189, %v188
    %v204 = vpack.c.b16 %v191, %v190
    %v205 = vpack.c.b16 %v193, %v192
    %v206 = vpack.c.b16 %v195, %v194
    %v207 = vpack.c.b16 %v197, %v196
    %v208 = vpack.c.b16 %v199, %v198
    %v209 = vpack.c.b16 %v201, %v200
    %218 = vmatprep.subr.bf16.mxu0 0
    %219 = vmatpush1.bf16.msra.mxu0 %v209
    %220 = vmatprep.subr.bf16.mxu0 0
    %221 = vmatpush1.bf16.msra.mxu0 %v208
    %222 = vmatprep.subr.bf16.mxu0 0
    %223 = vmatpush1.bf16.msra.mxu0 %v207
    %224 = vmatprep.subr.bf16.mxu0 0
    %225 = vmatpush1.bf16.msra.mxu0 %v206
    %226 = vmatprep.subr.bf16.mxu0 0
    %227 = vmatpush1.bf16.msra.mxu0 %v205
    %228 = vmatprep.subr.bf16.mxu0 0
    %229 = vmatpush1.bf16.msra.mxu0 %v204
    %230 = vmatprep.subr.bf16.mxu0 0
    %231 = vmatpush1.bf16.msra.mxu0 %v203
    %232 = vmatprep.subr.bf16.mxu0 0
    %233 = vmatpush1.bf16.msra.mxu0 %v202
    %234 = vmatprep.subr.bf16.mxu0 0
    %235 = vmatpush2.bf16.msra.mxu0 0
    %236 = vmatprep.subr.bf16.mxu0 0
    %237 = vmatpush2.bf16.msra.mxu0 0
    %238 = vmatprep.subr.bf16.mxu0 0
    %239 = vmatpush2.bf16.msra.mxu0 0
    %240 = vmatprep.subr.bf16.mxu0 0
    %241 = vmatpush2.bf16.msra.mxu0 0
    %242 = vmatprep.subr.bf16.mxu0 0
    %243 = vmatpush2.bf16.msra.mxu0 0
    %244 = vmatprep.subr.bf16.mxu0 0
    %245 = vmatpush2.bf16.msra.mxu0 0
    %246 = vmatprep.subr.bf16.mxu0 0
    %247 = vmatpush2.bf16.msra.mxu0 0
    %248 = vmatprep.subr.bf16.mxu0 0
    %249 = vmatpush2.bf16.msra.mxu0 0
    %250 = vmatprep.mubr.bf16.mxu0 0
    %251 = vmatmul.mubr.bf16.gmra.mxu0 %v146
    %v252 = vpop.f32.mrf.mxu0
    %v253 = vadd.f32 %v168, %v252
    %v254 = vpop.f32.mrf.mxu0
    %v255 = vpop.f32.mrf.mxu0
    %v256 = vpop.f32.mrf.mxu0
    %257 = vdwg.mxu0
    %v258 = vmax.f32 %v253, 0.0
    %v259 = vpack.c.bf16 %v258, %v258
    %v260 = vld [vmem:[#allocation8] sm:$0xf]
    %v261 = vld [vmem:[#allocation8 + $0x4] sm:$0xf]
    %v262 = vld [vmem:[#allocation8 + $0x8] sm:$0xf]
    %v263 = vld [vmem:[#allocation8 + $0xc] sm:$0xf]
    %v264 = vld [vmem:[#allocation8 + $0x10] sm:$0xf]
    %v265 = vld [vmem:[#allocation8 + $0x14] sm:$0xf]
    %v266 = vld [vmem:[#allocation8 + $0x18] sm:$0xf]
    %v267 = vld [vmem:[#allocation8 + $0x1c] sm:$0xf]
    %v268 = vld [vmem:[#allocation8 + $0x20] sm:$0xf]
    %v269 = vld [vmem:[#allocation8 + $0x24] sm:$0xf]
    %v270 = vld [vmem:[#allocation8 + $0x28] sm:$0xf]
    %v271 = vld [vmem:[#allocation8 + $0x2c] sm:$0xf]
    %v272 = vld [vmem:[#allocation8 + $0x30] sm:$0xf]
    %v273 = vld [vmem:[#allocation8 + $0x34] sm:$0xf]
    %v274 = vld [vmem:[#allocation8 + $0x38] sm:$0xf]
    %v275 = vld [vmem:[#allocation8 + $0x3c] sm:$0xf]
    %v276 = vld [vmem:[%s6] sm:$0x1]
    %v278 = vlaneseq
    %v279 = vshrl.u32 %v278, 7
    %v280 = vsub.s32 0, %v279
    %v281 = vrot.slane %v276, %v280
    %v299 = vunpack.c.l.b16 %v260
    %v300 = vunpack.c.l.b16 %v261
    %v301 = vunpack.c.l.b16 %v262
    %v302 = vunpack.c.l.b16 %v263
    %v303 = vunpack.c.l.b16 %v264
    %v304 = vunpack.c.l.b16 %v265
    %v305 = vunpack.c.l.b16 %v266
    %v306 = vunpack.c.l.b16 %v267
    %v307 = vunpack.c.l.b16 %v268
    %v308 = vunpack.c.l.b16 %v269
    %v309 = vunpack.c.l.b16 %v270
    %v310 = vunpack.c.l.b16 %v271
    %v311 = vunpack.c.l.b16 %v272
    %v312 = vunpack.c.l.b16 %v273
    %v313 = vunpack.c.l.b16 %v274
    %v314 = vunpack.c.l.b16 %v275
    %v315 = vpack.c.b16 %v300, %v299
    %v316 = vpack.c.b16 %v302, %v301
    %v317 = vpack.c.b16 %v304, %v303
    %v318 = vpack.c.b16 %v306, %v305
    %v319 = vpack.c.b16 %v308, %v307
    %v320 = vpack.c.b16 %v310, %v309
    %v321 = vpack.c.b16 %v312, %v311
    %v322 = vpack.c.b16 %v314, %v313
    %331 = vmatprep.subr.bf16.mxu0 0
    %332 = vmatpush1.bf16.msra.mxu0 %v322
    %333 = vmatprep.subr.bf16.mxu0 0
    %334 = vmatpush1.bf16.msra.mxu0 %v321
    %335 = vmatprep.subr.bf16.mxu0 0
    %336 = vmatpush1.bf16.msra.mxu0 %v320
    %337 = vmatprep.subr.bf16.mxu0 0
    %338 = vmatpush1.bf16.msra.mxu0 %v319
    %339 = vmatprep.subr.bf16.mxu0 0
    %340 = vmatpush1.bf16.msra.mxu0 %v318
    %341 = vmatprep.subr.bf16.mxu0 0
    %342 = vmatpush1.bf16.msra.mxu0 %v317
    %343 = vmatprep.subr.bf16.mxu0 0
    %344 = vmatpush1.bf16.msra.mxu0 %v316
    %345 = vmatprep.subr.bf16.mxu0 0
    %346 = vmatpush1.bf16.msra.mxu0 %v315
    %347 = vmatprep.subr.bf16.mxu0 0
    %348 = vmatpush2.bf16.msra.mxu0 0
    %349 = vmatprep.subr.bf16.mxu0 0
    %350 = vmatpush2.bf16.msra.mxu0 0
    %351 = vmatprep.subr.bf16.mxu0 0
    %352 = vmatpush2.bf16.msra.mxu0 0
    %353 = vmatprep.subr.bf16.mxu0 0
    %354 = vmatpush2.bf16.msra.mxu0 0
    %355 = vmatprep.subr.bf16.mxu0 0
    %356 = vmatpush2.bf16.msra.mxu0 0
    %357 = vmatprep.subr.bf16.mxu0 0
    %358 = vmatpush2.bf16.msra.mxu0 0
    %359 = vmatprep.subr.bf16.mxu0 0
    %360 = vmatpush2.bf16.msra.mxu0 0
    %361 = vmatprep.subr.bf16.mxu0 0
    %362 = vmatpush2.bf16.msra.mxu0 0
    %363 = vmatprep.mubr.bf16.mxu0 0
    %364 = vmatmul.mubr.bf16.gmra.mxu0 %v259
    %v365 = vpop.f32.mrf.mxu0
    %v366 = vadd.f32 %v281, %v365
    %v367 = vpop.f32.mrf.mxu0
    %v368 = vpop.f32.mrf.mxu0
    %v369 = vpop.f32.mrf.mxu0
    %370 = vdwg.mxu0
    %371 = vst [vmem:[#allocation10] sm:$0x3] %v366
    %v372 = vlaneseq
    %v373 = vand.u32 %v372, 127
    %vm374 = vcmp.lt.s32.totalorder %v373, 3
    %v375 = vsel %vm374, %v366, -inf
    %vm376 = vcmask 1041408
    %v377 = vsel %vm376, %v375, -inf
    %378 = vmax.xlane.f32.xlu0 %v377
    %v379 = vpop.xlane.xlu0 %378
    %vm380 = vcmask 1024
    %381 = vst.msk [vmem:[%s8] sm:$0x3] %vm380, %v379
    %vm382 = vcmp.eq.f32.partialorder %v375, %v379
    %v383 = vsel %vm382, %v373, 128
    %v384 = vsel %vm376, %v383, 2147483647
    %v385 = vand.u32 %v384, 65535
    %v386 = vshra.s32 %v384, 16
    %v387 = vcvt.s32.f32 %v385
    %v388 = vcvt.s32.f32 %v386
    %389 = vmin.xlane.f32.xlu0 %v388
    %v390 = vpop.xlane.xlu0 %389
    %vm391 = vcmp.eq.f32.partialorder %v388, %v390
    %v392 = vsel %vm391, %v387, inf
    %393 = vmin.xlane.f32.xlu0 %v392
    %v394 = vpop.xlane.xlu0 %393
    %v395 = vcvt.f32.s32 %v394
    %v396 = vcvt.f32.s32 %v390
    %v397 = vshll.u32 %v396, 16
    %v398 = vadd.s32 %v397, %v395
    %399 = vst.msk [vmem:[%s9] sm:$0x3] %vm380, %v398
    // Predicated region
    $region46: #{tpu_custom_call.1} parent=1 // pred_check
      _
    $region47: #{tpu_custom_call.1} parent=1 // pred_check_branch
      %401 = sbr.rel (0) target = $region49
    $region48: #{tpu_custom_call.1} parent=1 // pred_region
      %s403 = ssub.s32 32, 32
      %404 = vsyncadd [#allocation4], %s403
      %s406 = sshll.u32 [#allocation10], 4
      %s407 = int_to_ptr.vmem [resolvable:$true] %s406
      %409 = dma.vmem_to_hbm [thread:$0]  %s407, 32, %s7, [#allocation4]
    $region49: #{tpu_custom_call.1} parent=1 // pred_fallthru
      _
    // Predicated region
    $region50: #{tpu_custom_call.1} parent=1 // pred_check
      _
    $region51: #{tpu_custom_call.1} parent=1 // pred_check_branch
      %411 = sbr.rel (0) target = $region53
    $region52: #{tpu_custom_call.1} parent=1 // pred_region
      _
    $region53: #{tpu_custom_call.1} parent=1 // pred_fallthru
      _
    // Predicated region
    $region54: #{tpu_custom_call.1} parent=1 // pred_check
      _
    $region55: #{tpu_custom_call.1} parent=1 // pred_check_branch
      %413 = sbr.rel (0) target = $region57
    $region56: #{tpu_custom_call.1} parent=1 // pred_region
      _
    $region57: #{tpu_custom_call.1} parent=1 // pred_fallthru
      _
    // Predicated region
    $region58: #{tpu_custom_call.1} parent=1 // pred_check
      _
    $region59: #{tpu_custom_call.1} parent=1 // pred_check_branch
      %415 = sbr.rel (0) target = $region61
    $region60: #{tpu_custom_call.1} parent=1 // pred_region
      %416 = dma.done [#allocation4], 32
    $region61: #{tpu_custom_call.1} parent=1 // pred_fallthru
      _
    // Predicated region
    $region62: #{tpu_custom_call.1} parent=1 // pred_check
      _
    $region63: #{tpu_custom_call.1} parent=1 // pred_check_branch
      %418 = sbr.rel (0) target = $region65
    $region64: #{tpu_custom_call.1} parent=1 // pred_region
      _
    $region65: #{tpu_custom_call.1} parent=1 // pred_fallthru
      _
    // Predicated region
    $region66: #{tpu_custom_call.1} parent=1 // pred_check
      _
    $region67: #{tpu_custom_call.1} parent=1 // pred_check_branch
      %420 = sbr.rel (0) target = $region69
    $region68: #{tpu_custom_call.1} parent=1 // pred_region
      _
    $region69: #{tpu_custom_call.1} parent=1 // pred_fallthru
      _
    %421 = vsyncpa [#allocation3], 1
    %422 = vsyncpa [#allocation6], 1
    %423 = vsyncpa [#allocation9], 1
    %424 = vsyncpa [#allocation4], 1

</llo_original>
